<compile_context>
chip_gen: v6e
topology: v6e:2x2x1
jax: 0.10.0
libtpu: 0.0.40
codegen_flags: <defaults>
</compile_context>

<pallas_src>
import math

import jax
import jax.numpy as jnp
import numpy as np
from jax.experimental import pallas as pl
from jax.experimental.pallas import tpu as pltpu

# Module hyper-parameters (PyTorch defaults).
INPUT_DIM = 2
SEQ_LEN = 16
HEADS = 2
EMBED_DIM = 4
HEAD_DIM = EMBED_DIM // HEADS  # = 2


def temporal_mhsa_kernel(x_ref, slab_ref, out_ref):
    # x_ref:    (Bt, S, Din)
    # slab_ref: (Din + 3, W) packed params:
    #             rows [0, Din)        cols [0, 3E) : W_qkv   (Din, 3*EMBED)
    #             row  Din             cols [0, 3E) : b_qkv
    #             row  Din + 1         cols [0, S)  : rel     (lane-dense)
    #             row  Din + 2         cols [0, E)  : W_o ;  col E : b_o
    # out_ref:  (Bt, S)  -- lane-dense output (seq on lanes)
    Bt, S, Din = x_ref.shape
    E, H, hd = EMBED_DIM, HEADS, HEAD_DIM

    x = x_ref[...].astype(jnp.float32)                    # (Bt, S, Din)
    slab = slab_ref[...].astype(jnp.float32)              # (Din+3, W)

    W_qkv = slab[0:Din, 0:3 * E]                          # (Din, 3E)
    b_qkv = slab[Din:Din + 1, 0:3 * E]                    # (1, 3E)
    rel = slab[Din + 1:Din + 2, 0:S]                      # (1, S)
    w_o = slab[Din + 2:Din + 3, 0:E]                      # (1, E)
    b_o = slab[Din + 2:Din + 3, E:E + 1]                  # (1, 1)

    # Fused QKV projection. Din is tiny (=2), so do it as VPU broadcast-FMAs
    # instead of an MXU push/pop per head.
    proj = jnp.broadcast_to(b_qkv, (Bt, S, 3 * E))        # (Bt, S, 3E)
    for d in range(Din):                                  # static unroll
        proj = proj + x[:, :, d:d + 1] * W_qkv[d:d + 1, :]

    scale = 1.0 / math.sqrt(hd)
    out_acc = jnp.broadcast_to(b_o, (Bt, S))              # fused o_proj bias

    for h in range(H):                                    # static unroll over heads
        base = 3 * hd * h
        q = proj[:, :, base:base + hd]                    # (Bt, S, hd)
        k = proj[:, :, base + hd:base + 2 * hd]           # (Bt, S, hd)
        v = proj[:, :, base + 2 * hd:base + 3 * hd]       # (Bt, S, hd)

        # logits for (k + rel):  q.k + rel_k * sum_d(q_d)
        logits = jnp.einsum('bqd,bkd->bqk', q, k,
                            preferred_element_type=jnp.float32)       # (Bt,S,S)
        qsum = jnp.sum(q, axis=-1, keepdims=True)                     # (Bt,S,1)
        logits = (logits + qsum * rel[None, :, :]) * scale

        m = jnp.max(logits, axis=-1, keepdims=True)
        p = jnp.exp(logits - m)
        denom = jnp.sum(p, axis=-1, keepdims=True)
        attn = p * pl.reciprocal(denom, approx=True)                  # EUP recip

        vals = jnp.einsum('bqk,bkd->bqd', attn, v,
                          preferred_element_type=jnp.float32)         # (Bt,S,hd)

        # Fused output projection: concat over heads == sum of per-head slices of W_o.
        out_acc = out_acc + jnp.sum(vals * w_o[None, :, h * hd:(h + 1) * hd],
                                    axis=-1)                          # (Bt, S)

    out_ref[...] = out_acc.astype(out_ref.dtype)


def _pick_block_batch(B):
    # Output block is (Bt, S): its second-minor dim must be a multiple of 8 or
    # equal the full batch. For large B prefer a multiple-of-8 tile that keeps
    # >= 2 grid steps (v7x has 2 TensorCores); otherwise take the whole batch.
    for bt in (64, 56, 48, 40, 32, 24, 16, 8):
        if B % bt == 0 and B // bt >= 2:
            return bt
    return B


def temporal_mhsa(x, qkv_w, qkv_b, rel, o_w, o_b):
    # qkv_w: (Din, 3*EMBED) pre-transposed, qkv_b: (3*EMBED,),
    # rel: (S, 1), o_w: (EMBED, 1), o_b: (1,)
    B, S, Din = x.shape
    E = EMBED_DIM

    # Pack all parameters into one small slab (plain-JAX glue, runs once).
    width = max(3 * E, S, E + 1)
    slab = jnp.zeros((Din + 3, width), jnp.float32)
    slab = slab.at[0:Din, 0:3 * E].set(qkv_w.astype(jnp.float32))
    slab = slab.at[Din, 0:3 * E].set(qkv_b.astype(jnp.float32))
    slab = slab.at[Din + 1, 0:S].set(rel.reshape(S).astype(jnp.float32))
    slab = slab.at[Din + 2, 0:E].set(o_w.reshape(E).astype(jnp.float32))
    slab = slab.at[Din + 2, E].set(o_b.reshape(()).astype(jnp.float32))

    Bt = _pick_block_batch(B)
    grid = (B // Bt,)

    out2d = pl.pallas_call(
        temporal_mhsa_kernel,
        out_shape=jax.ShapeDtypeStruct((B, S), x.dtype),
        grid_spec=pltpu.PrefetchScalarGridSpec(
            num_scalar_prefetch=0,
            grid=grid,
            in_specs=[
                pl.BlockSpec((Bt, S, Din), lambda b: (b, 0, 0)),
                pl.BlockSpec(slab.shape, lambda b: (0, 0)),
            ],
            out_specs=pl.BlockSpec((Bt, S), lambda b: (b, 0)),
        ),
        compiler_params=pltpu.CompilerParams(dimension_semantics=("parallel",)),
    )(x, slab)

    return out2d[..., None]                               # (B, S, 1)


def reference(x, qkv_w, qkv_b, rel, o_w, o_b):
    B, S, _ = x.shape
    qkv = x @ qkv_w + qkv_b                               # (B, S, 12)
    qkv = qkv.reshape(B, S, HEADS, 3 * HEAD_DIM).transpose(0, 2, 1, 3)
    q, k, v = jnp.split(qkv, 3, axis=-1)
    k = k + rel.reshape(1, 1, S, 1)
    logits = jnp.einsum('bhqd,bhkd->bhqk', q, k) / math.sqrt(HEAD_DIM)
    attn = jax.nn.softmax(logits, axis=-1)
    vals = jnp.einsum('bhqk,bhkd->bhqd', attn, v)
    vals = vals.transpose(0, 2, 1, 3).reshape(B, S, EMBED_DIM)
    return vals @ o_w + o_b


if __name__ == "__main__":
    B = 2
    key = jax.random.PRNGKey(0)
    k0, k1, k2, k3, k4, k5 = jax.random.split(key, 6)

    # Deterministic synthetic parameters (shapes from the module's __init__).
    qkv_w = jax.random.normal(k0, (INPUT_DIM, 3 * EMBED_DIM), jnp.float32) * 0.2
    qkv_b = jax.random.normal(k1, (3 * EMBED_DIM,), jnp.float32) * 0.1
    rel = jax.random.normal(k2, (SEQ_LEN, 1), jnp.float32)      # torch rel (1,1,S,1)
    o_w = jax.random.normal(k3, (EMBED_DIM, 1), jnp.float32) * 0.2
    o_b = jax.random.normal(k4, (1,), jnp.float32) * 0.1
    x = jax.random.normal(k5, (B, SEQ_LEN, INPUT_DIM), jnp.float32)

    out = jax.block_until_ready(temporal_mhsa(x, qkv_w, qkv_b, rel, o_w, o_b))
    ref = jax.block_until_ready(reference(x, qkv_w, qkv_b, rel, o_w, o_b))

    assert out.shape == (B, SEQ_LEN, 1), out.shape
    # Tolerance covers the EUP approximate reciprocal used for softmax normalization.
    np.testing.assert_allclose(np.asarray(out), np.asarray(ref), rtol=5e-3, atol=5e-3)

    print("KERNEL_OK")
</pallas_src>

<mosaic_0001>
module attributes {stable_mosaic.version = 11 : i64} {
  func.func @temporal_mhsa_kernel(%arg0: i32, %arg1: memref<2x16x2xf32, #tpu.memory_space<vmem>>, %arg2: memref<5x16xf32, #tpu.memory_space<vmem>>, %arg3: memref<2x16xf32, #tpu.memory_space<vmem>>) attributes {dimension_semantics = [#tpu.dimension_semantics<parallel>], iteration_bounds = array<i64: 1>, scalar_prefetch = 0 : i64, scratch_operands = 0 : i64, tpu.core_type = #tpu.core_type<tc>, window_params = [{transform_indices = @transform_0, window_bounds = array<i64: 2, 16, 2>}, {pipeline_mode = #tpu.pipeline_mode<synchronous>, transform_indices = @transform_1, window_bounds = array<i64: 5, 16>}, {transform_indices = @transform_2, window_bounds = array<i64: 2, 16>}]} {
    %c0 = arith.constant 0 : index
    %c0_0 = arith.constant 0 : index
    %c0_1 = arith.constant 0 : index
    %0 = vector.load %arg1[%c0, %c0_0, %c0_1] : memref<2x16x2xf32, #tpu.memory_space<vmem>>, vector<2x16x2xf32>
    %c0_2 = arith.constant 0 : index
    %c0_3 = arith.constant 0 : index
    %1 = vector.load %arg2[%c0_2, %c0_3] : memref<5x16xf32, #tpu.memory_space<vmem>>, vector<5x16xf32>
    %2 = vector.extract_strided_slice %1 {offsets = [0, 0], sizes = [2, 12], strides = [1, 1]} : vector<5x16xf32> to vector<2x12xf32>
    %3 = vector.extract_strided_slice %1 {offsets = [2, 0], sizes = [1, 12], strides = [1, 1]} : vector<5x16xf32> to vector<1x12xf32>
    %4 = vector.extract_strided_slice %1 {offsets = [3, 0], sizes = [1, 16], strides = [1, 1]} : vector<5x16xf32> to vector<1x16xf32>
    %5 = vector.extract_strided_slice %1 {offsets = [4, 0], sizes = [1, 4], strides = [1, 1]} : vector<5x16xf32> to vector<1x4xf32>
    %6 = vector.extract_strided_slice %1 {offsets = [4, 4], sizes = [1, 1], strides = [1, 1]} : vector<5x16xf32> to vector<1x1xf32>
    %7 = vector.shape_cast %3 : vector<1x12xf32> to vector<1x1x12xf32>
    %8 = vector.broadcast %7 : vector<1x1x12xf32> to vector<2x16x12xf32>
    %9 = vector.extract_strided_slice %0 {offsets = [0, 0, 0], sizes = [2, 16, 1], strides = [1, 1, 1]} : vector<2x16x2xf32> to vector<2x16x1xf32>
    %10 = vector.extract_strided_slice %2 {offsets = [0, 0], sizes = [1, 12], strides = [1, 1]} : vector<2x12xf32> to vector<1x12xf32>
    %11 = vector.shape_cast %10 : vector<1x12xf32> to vector<1x1x12xf32>
    %12 = vector.broadcast %9 : vector<2x16x1xf32> to vector<2x16x12xf32>
    %13 = vector.broadcast %11 : vector<1x1x12xf32> to vector<2x16x12xf32>
    %14 = arith.mulf %12, %13 : vector<2x16x12xf32>
    %15 = arith.addf %8, %14 : vector<2x16x12xf32>
    %16 = vector.extract_strided_slice %0 {offsets = [0, 0, 1], sizes = [2, 16, 1], strides = [1, 1, 1]} : vector<2x16x2xf32> to vector<2x16x1xf32>
    %17 = vector.extract_strided_slice %2 {offsets = [1, 0], sizes = [1, 12], strides = [1, 1]} : vector<2x12xf32> to vector<1x12xf32>
    %18 = vector.shape_cast %17 : vector<1x12xf32> to vector<1x1x12xf32>
    %19 = vector.broadcast %16 : vector<2x16x1xf32> to vector<2x16x12xf32>
    %20 = vector.broadcast %18 : vector<1x1x12xf32> to vector<2x16x12xf32>
    %21 = arith.mulf %19, %20 : vector<2x16x12xf32>
    %22 = arith.addf %15, %21 : vector<2x16x12xf32>
    %23 = vector.shape_cast %6 : vector<1x1xf32> to vector<1x1xf32>
    %24 = vector.broadcast %23 : vector<1x1xf32> to vector<2x16xf32>
    %25 = vector.extract_strided_slice %22 {offsets = [0, 0, 0], sizes = [2, 16, 2], strides = [1, 1, 1]} : vector<2x16x12xf32> to vector<2x16x2xf32>
    %26 = vector.extract_strided_slice %22 {offsets = [0, 0, 2], sizes = [2, 16, 2], strides = [1, 1, 1]} : vector<2x16x12xf32> to vector<2x16x2xf32>
    %27 = vector.extract_strided_slice %22 {offsets = [0, 0, 4], sizes = [2, 16, 2], strides = [1, 1, 1]} : vector<2x16x12xf32> to vector<2x16x2xf32>
    "tpu.trace_start"() <{level = 10 : i32, message = "bqd,bkd->bqk"}> : () -> ()
    %cst = arith.constant dense<0.000000e+00> : vector<2x16x16xf32>
    %28 = tpu.matmul %25, %26, %cst {dimension_numbers = #tpu.dot_dimension_numbers<[2], [2], [1], [1], [0, 0, 0, 1, 1, 1], [0], [0]>} : vector<2x16x2xf32>, vector<2x16x2xf32>, vector<2x16x16xf32> -> vector<2x16x16xf32>
    "tpu.trace_stop"() : () -> ()
    %cst_4 = arith.constant dense<0.000000e+00> : vector<2x16xf32>
    %29 = vector.multi_reduction <add>, %25, %cst_4 [2] : vector<2x16x2xf32> to vector<2x16xf32>
    %30 = vector.shape_cast %29 : vector<2x16xf32> to vector<2x16x1xf32>
    %31 = vector.shape_cast %4 : vector<1x16xf32> to vector<1x1x16xf32>
    %32 = vector.broadcast %30 : vector<2x16x1xf32> to vector<2x16x16xf32>
    %33 = vector.broadcast %31 : vector<1x1x16xf32> to vector<2x16x16xf32>
    %34 = arith.mulf %32, %33 : vector<2x16x16xf32>
    %35 = arith.addf %28, %34 : vector<2x16x16xf32>
    %cst_5 = arith.constant 0.707106769 : f32
    %36 = vector.broadcast %cst_5 : f32 to vector<2x16x16xf32>
    %37 = arith.mulf %35, %36 : vector<2x16x16xf32>
    %cst_6 = arith.constant dense<0xFF800000> : vector<2x16xf32>
    %38 = vector.multi_reduction <maximumf>, %37, %cst_6 [2] : vector<2x16x16xf32> to vector<2x16xf32>
    %39 = vector.shape_cast %38 : vector<2x16xf32> to vector<2x16x1xf32>
    %40 = vector.broadcast %39 : vector<2x16x1xf32> to vector<2x16x16xf32>
    %41 = arith.subf %37, %40 : vector<2x16x16xf32>
    %42 = math.exp %41 : vector<2x16x16xf32>
    %cst_7 = arith.constant dense<0.000000e+00> : vector<2x16xf32>
    %43 = vector.multi_reduction <add>, %42, %cst_7 [2] : vector<2x16x16xf32> to vector<2x16xf32>
    %44 = vector.shape_cast %43 : vector<2x16xf32> to vector<2x16x1xf32>
    %45 = tpu.reciprocal %44 {approx = true} : vector<2x16x1xf32> -> vector<2x16x1xf32>
    %46 = vector.broadcast %45 : vector<2x16x1xf32> to vector<2x16x16xf32>
    %47 = arith.mulf %42, %46 : vector<2x16x16xf32>
    "tpu.trace_start"() <{level = 10 : i32, message = "bqk,bkd->bqd"}> : () -> ()
    %cst_8 = arith.constant dense<0.000000e+00> : vector<2x16x2xf32>
    %48 = tpu.matmul %47, %27, %cst_8 {dimension_numbers = #tpu.dot_dimension_numbers<[2], [1], [1], [2], [0, 0, 0, 1, 1, 2], [0], [0]>} : vector<2x16x16xf32>, vector<2x16x2xf32>, vector<2x16x2xf32> -> vector<2x16x2xf32>
    "tpu.trace_stop"() : () -> ()
    %49 = vector.extract_strided_slice %5 {offsets = [0, 0], sizes = [1, 2], strides = [1, 1]} : vector<1x4xf32> to vector<1x2xf32>
    %50 = vector.shape_cast %49 : vector<1x2xf32> to vector<1x1x2xf32>
    %51 = vector.broadcast %50 : vector<1x1x2xf32> to vector<2x16x2xf32>
    %52 = arith.mulf %48, %51 : vector<2x16x2xf32>
    %cst_9 = arith.constant dense<0.000000e+00> : vector<2x16xf32>
    %53 = vector.multi_reduction <add>, %52, %cst_9 [2] : vector<2x16x2xf32> to vector<2x16xf32>
    %54 = arith.addf %24, %53 : vector<2x16xf32>
    %55 = vector.extract_strided_slice %22 {offsets = [0, 0, 6], sizes = [2, 16, 2], strides = [1, 1, 1]} : vector<2x16x12xf32> to vector<2x16x2xf32>
    %56 = vector.extract_strided_slice %22 {offsets = [0, 0, 8], sizes = [2, 16, 2], strides = [1, 1, 1]} : vector<2x16x12xf32> to vector<2x16x2xf32>
    %57 = vector.extract_strided_slice %22 {offsets = [0, 0, 10], sizes = [2, 16, 2], strides = [1, 1, 1]} : vector<2x16x12xf32> to vector<2x16x2xf32>
    "tpu.trace_start"() <{level = 10 : i32, message = "bqd,bkd->bqk"}> : () -> ()
    %cst_10 = arith.constant dense<0.000000e+00> : vector<2x16x16xf32>
    %58 = tpu.matmul %55, %56, %cst_10 {dimension_numbers = #tpu.dot_dimension_numbers<[2], [2], [1], [1], [0, 0, 0, 1, 1, 1], [0], [0]>} : vector<2x16x2xf32>, vector<2x16x2xf32>, vector<2x16x16xf32> -> vector<2x16x16xf32>
    "tpu.trace_stop"() : () -> ()
    %cst_11 = arith.constant dense<0.000000e+00> : vector<2x16xf32>
    %59 = vector.multi_reduction <add>, %55, %cst_11 [2] : vector<2x16x2xf32> to vector<2x16xf32>
    %60 = vector.shape_cast %59 : vector<2x16xf32> to vector<2x16x1xf32>
    %61 = vector.shape_cast %4 : vector<1x16xf32> to vector<1x1x16xf32>
    %62 = vector.broadcast %60 : vector<2x16x1xf32> to vector<2x16x16xf32>
    %63 = vector.broadcast %61 : vector<1x1x16xf32> to vector<2x16x16xf32>
    %64 = arith.mulf %62, %63 : vector<2x16x16xf32>
    %65 = arith.addf %58, %64 : vector<2x16x16xf32>
    %cst_12 = arith.constant 0.707106769 : f32
    %66 = vector.broadcast %cst_12 : f32 to vector<2x16x16xf32>
    %67 = arith.mulf %65, %66 : vector<2x16x16xf32>
    %cst_13 = arith.constant dense<0xFF800000> : vector<2x16xf32>
    %68 = vector.multi_reduction <maximumf>, %67, %cst_13 [2] : vector<2x16x16xf32> to vector<2x16xf32>
    %69 = vector.shape_cast %68 : vector<2x16xf32> to vector<2x16x1xf32>
    %70 = vector.broadcast %69 : vector<2x16x1xf32> to vector<2x16x16xf32>
    %71 = arith.subf %67, %70 : vector<2x16x16xf32>
    %72 = math.exp %71 : vector<2x16x16xf32>
    %cst_14 = arith.constant dense<0.000000e+00> : vector<2x16xf32>
    %73 = vector.multi_reduction <add>, %72, %cst_14 [2] : vector<2x16x16xf32> to vector<2x16xf32>
    %74 = vector.shape_cast %73 : vector<2x16xf32> to vector<2x16x1xf32>
    %75 = tpu.reciprocal %74 {approx = true} : vector<2x16x1xf32> -> vector<2x16x1xf32>
    %76 = vector.broadcast %75 : vector<2x16x1xf32> to vector<2x16x16xf32>
    %77 = arith.mulf %72, %76 : vector<2x16x16xf32>
    "tpu.trace_start"() <{level = 10 : i32, message = "bqk,bkd->bqd"}> : () -> ()
    %cst_15 = arith.constant dense<0.000000e+00> : vector<2x16x2xf32>
    %78 = tpu.matmul %77, %57, %cst_15 {dimension_numbers = #tpu.dot_dimension_numbers<[2], [1], [1], [2], [0, 0, 0, 1, 1, 2], [0], [0]>} : vector<2x16x16xf32>, vector<2x16x2xf32>, vector<2x16x2xf32> -> vector<2x16x2xf32>
    "tpu.trace_stop"() : () -> ()
    %79 = vector.extract_strided_slice %5 {offsets = [0, 2], sizes = [1, 2], strides = [1, 1]} : vector<1x4xf32> to vector<1x2xf32>
    %80 = vector.shape_cast %79 : vector<1x2xf32> to vector<1x1x2xf32>
    %81 = vector.broadcast %80 : vector<1x1x2xf32> to vector<2x16x2xf32>
    %82 = arith.mulf %78, %81 : vector<2x16x2xf32>
    %cst_16 = arith.constant dense<0.000000e+00> : vector<2x16xf32>
    %83 = vector.multi_reduction <add>, %82, %cst_16 [2] : vector<2x16x2xf32> to vector<2x16xf32>
    %84 = arith.addf %54, %83 : vector<2x16xf32>
    %c0_17 = arith.constant 0 : index
    %c0_18 = arith.constant 0 : index
    %85 = vector.load %arg3[%c0_17, %c0_18] : memref<2x16xf32, #tpu.memory_space<vmem>>, vector<2x16xf32>
    tpu.vector_store %arg3[%c0_17, %c0_18], %84 {strides = array<i32>} : memref<2x16xf32, #tpu.memory_space<vmem>>, vector<2x16xf32>,
    return
  }
  func.func @transform_0(%arg0: i32) -> (i32, i32, i32) {
    %c0_i32 = arith.constant 0 : i32
    %c0_i32_0 = arith.constant 0 : i32
    %c0_i32_1 = arith.constant 0 : i32
    return %arg0, %c0_i32, %c0_i32_0 : i32, i32, i32
  }
  func.func @transform_1(%arg0: i32) -> (i32, i32) {
    %c0_i32 = arith.constant 0 : i32
    %c0_i32_0 = arith.constant 0 : i32
    %c0_i32_1 = arith.constant 0 : i32
    return %c0_i32, %c0_i32_0 : i32, i32
  }
  func.func @transform_2(%arg0: i32) -> (i32, i32) {
    %c0_i32 = arith.constant 0 : i32
    %c0_i32_0 = arith.constant 0 : i32
    return %arg0, %c0_i32 : i32, i32
  }
}

</mosaic_0001>

<llo_original>
// kernel: tpu_custom_call.1
$region0: #{tpu_custom_call.1}
  #allocation0 [shape = 'u32[]', space=smem, size = 0x4, offset = 0x4, fixed_abs, tag = 'smem constant byte address 0x4 - core index']
  #allocation1 [shape = 'u32[144,128]{1,0:T(1,128)}', space=vmem, size = 0x12000, scoped, tag = 'internal scratch']
  %s0 = inlined_call_operand.vmem [shape: f32[2,16,2], index: 0, kind: input, shape index: {}]
  %s1 = inlined_call_operand.vmem [shape: f32[5,16], index: 1, kind: input, shape index: {}]
  %s2 = inlined_call_operand.hbm [shape: f32[2,16], index: 2, kind: output, shape index: {}]
  %s3 = sld [smem:[#allocation0]]
  $region18: #{tpu_custom_call.1} parent=0
    _
  %s5 = ssub.s32 1, %s3
  %s6 = scalar_select 0, %s5, %s3
  $region1: #{tpu_custom_call.1} parent=0
    #allocation2 [shape = 'u8[1024]{0}', space=vmem, size = 0x400, scoped, tag = 'output window, operand 0, single buffered']
    #allocation3 [shape = 's32[1]{0}', space=sflag, size = 0x4, scoped, tag = 'scoped memory for tpu_custom_call.1']
    %7 = vsyncpa [#allocation3], 0
    // Predicated region
    $region2: #{tpu_custom_call.1} parent=1 // pred_check
      _
    $region3: #{tpu_custom_call.1} parent=1 // pred_check_branch
      %9 = sbr.rel (0) target = $region5
    $region4: #{tpu_custom_call.1} parent=1 // pred_region
      _
    $region5: #{tpu_custom_call.1} parent=1 // pred_fallthru
      _
    // Predicated region
    $region6: #{tpu_custom_call.1} parent=1 // pred_check
      _
    $region7: #{tpu_custom_call.1} parent=1 // pred_check_branch
      %11 = sbr.rel (0) target = $region9
    $region8: #{tpu_custom_call.1} parent=1 // pred_region
      _
    $region9: #{tpu_custom_call.1} parent=1 // pred_fallthru
      _
    %v12 = vld [vmem:[%s0] sm:$0xff]
    %v13 = vld [vmem:[%s0 + $0x8] sm:$0xff]
    %v14 = vld [vmem:[%s0 + $0x10] sm:$0xff]
    %v15 = vld [vmem:[%s0 + $0x18] sm:$0xff]
    %v16 = vld [vmem:[%s1] sm:$0x1f]
    %v17 = vlaneseq
    %v18 = vshrl.u32 %v17, 7
    %v19 = vsub.s32 2, %v18
    %v20 = vrot.slane %v16, %v19
    %22 = vset.pattern.permute.xlu0 0
    %23 = vperm.xlu0 %22, %v12
    %v24 = vpop.permute.xlu0 %23
    %27 = vset.pattern.permute.xlu0 0
    %28 = vperm.xlu0 %27, %v13
    %v29 = vpop.permute.xlu0 %28
    %32 = vset.pattern.permute.xlu0 0
    %33 = vperm.xlu0 %32, %v14
    %v34 = vpop.permute.xlu0 %33
    %37 = vset.pattern.permute.xlu0 0
    %38 = vperm.xlu0 %37, %v15
    %v39 = vpop.permute.xlu0 %38
    %v41 = vlaneseq
    %v42 = vshrl.u32 %v41, 7
    %v43 = vsub.s32 0, %v42
    %v44 = vrot.slane %v16, %v43
    %v45 = vmul.f32 %v24, %v44
    %v46 = vmul.f32 %v29, %v44
    %v47 = vmul.f32 %v34, %v44
    %v48 = vmul.f32 %v39, %v44
    %v49 = vadd.f32 %v20, %v45
    %v50 = vadd.f32 %v20, %v46
    %v51 = vadd.f32 %v20, %v47
    %v52 = vadd.f32 %v20, %v48
    %53 = vset.pattern.permute.xlu0 1
    %54 = vperm.xlu0 %53, %v12
    %v55 = vpop.permute.xlu0 %54
    %57 = vset.pattern.permute.xlu0 1
    %58 = vperm.xlu0 %57, %v13
    %v59 = vpop.permute.xlu0 %58
    %61 = vset.pattern.permute.xlu0 1
    %62 = vperm.xlu0 %61, %v14
    %v63 = vpop.permute.xlu0 %62
    %65 = vset.pattern.permute.xlu0 1
    %66 = vperm.xlu0 %65, %v15
    %v67 = vpop.permute.xlu0 %66
    %v69 = vlaneseq
    %v70 = vshrl.u32 %v69, 7
    %v71 = vsub.s32 1, %v70
    %v72 = vrot.slane %v16, %v71
    %v73 = vmul.f32 %v55, %v72
    %v74 = vmul.f32 %v59, %v72
    %v75 = vmul.f32 %v63, %v72
    %v76 = vmul.f32 %v67, %v72
    %v77 = vadd.f32 %v49, %v73
    %v78 = vadd.f32 %v50, %v74
    %v79 = vadd.f32 %v51, %v75
    %v80 = vadd.f32 %v52, %v76
    %v82 = vrot.slane %v16, 4
    %83 = vrot.lane.b32.xlu0 %v82, 124
    %v84 = vpop.permute.xlu0 %83
    %s85 = vtos %v84
    %v86 = vstv %s85
    %vm88 = vcmask 15360
    %v89 = vsel %vm88, %v77, 0.0
    %90 = vadd.xlane.f32.xlu0 %v89
    %v91 = vpop.xlane.xlu0 %90
    %v92 = vsel %vm88, %v78, 0.0
    %93 = vadd.xlane.f32.xlu0 %v92
    %v94 = vpop.xlane.xlu0 %93
    %v95 = vsel %vm88, %v79, 0.0
    %96 = vadd.xlane.f32.xlu0 %v95
    %v97 = vpop.xlane.xlu0 %96
    %v98 = vsel %vm88, %v80, 0.0
    %99 = vadd.xlane.f32.xlu0 %v98
    %v100 = vpop.xlane.xlu0 %99
    %v101 = vlaneseq
    %v102 = vshrl.u32 %v101, 7
    %v103 = vsub.s32 3, %v102
    %v104 = vrot.slane %v16, %v103
    %v105 = vmul.f32 %v91, %v104
    %v106 = vmul.f32 %v94, %v104
    %v107 = vmul.f32 %v97, %v104
    %v108 = vmul.f32 %v100, %v104
    %111 = vrot.lane.b32.xlu0 %v77, 126
    %v112 = vpop.permute.xlu0 %111
    %113 = vrot.lane.b32.xlu0 %v78, 126
    %v114 = vpop.permute.xlu0 %113
    %v115 = vsel %vm88, %v77, 0
    %v117 = vsel %vm88, %v78, 0
    %v119 = vsel %vm88, %v112, 0
    %v121 = vsel %vm88, %v114, 0
    %123 = vmatprep.subr.mxu0 0.0
    %124 = vmatpush1.xpose.msra.mxu0 0.0
    %125 = vmatprep.subr.mxu0 0.0
    %126 = vmatpush1.xpose.msra.mxu0 0.0
    %127 = vmatprep.subr.mxu0 0.0
    %128 = vmatpush1.xpose.msra.mxu0 0.0
    %129 = vmatprep.subr.mxu0 0.0
    %130 = vmatpush1.xpose.msra.mxu0 0.0
    %131 = vmatprep.subr.mxu0 0.0
    %132 = vmatpush1.xpose.msra.mxu0 0.0
    %133 = vmatprep.subr.mxu0 0.0
    %134 = vmatpush1.xpose.msra.mxu0 0.0
    %135 = vmatprep.subr.mxu0 0.0
    %136 = vmatpush1.xpose.msra.mxu0 0.0
    %137 = vmatprep.subr.mxu0 0.0
    %138 = vmatpush1.xpose.msra.mxu0 0.0
    %139 = vmatprep.subr.mxu0 0.0
    %140 = vmatpush1.xpose.msra.mxu0 0.0
    %141 = vmatprep.subr.mxu0 0.0
    %142 = vmatpush1.xpose.msra.mxu0 0.0
    %143 = vmatprep.subr.mxu0 0.0
    %144 = vmatpush1.xpose.msra.mxu0 0.0
    %145 = vmatprep.subr.mxu0 0.0
    %146 = vmatpush1.xpose.msra.mxu0 0.0
    %147 = vmatprep.subr.mxu0 0.0
    %148 = vmatpush1.xpose.msra.mxu0 0.0
    %149 = vmatprep.subr.mxu0 0.0
    %150 = vmatpush1.xpose.msra.mxu0 0.0
    %151 = vmatprep.subr.mxu0 0.0
    %152 = vmatpush1.xpose.msra.mxu0 %v121
    %153 = vmatprep.subr.mxu0 0.0
    %154 = vmatpush1.xpose.msra.mxu0 %v119
    %155 = vmatprep.subr.mxu0 0.0
    %156 = vmatpush2.xpose.msra.mxu0 0.0
    %157 = vmatprep.subr.mxu0 0.0
    %158 = vmatpush2.xpose.msra.mxu0 0.0
    %159 = vmatprep.subr.mxu0 0.0
    %160 = vmatpush2.xpose.msra.mxu0 0.0
    %161 = vmatprep.subr.mxu0 0.0
    %162 = vmatpush2.xpose.msra.mxu0 0.0
    %163 = vmatprep.subr.mxu0 0.0
    %164 = vmatpush2.xpose.msra.mxu0 0.0
    %165 = vmatprep.subr.mxu0 0.0
    %166 = vmatpush2.xpose.msra.mxu0 0.0
    %167 = vmatprep.subr.mxu0 0.0
    %168 = vmatpush2.xpose.msra.mxu0 0.0
    %169 = vmatprep.subr.mxu0 0.0
    %170 = vmatpush2.xpose.msra.mxu0 0.0
    %171 = vmatprep.subr.mxu0 0.0
    %172 = vmatpush2.xpose.msra.mxu0 0.0
    %173 = vmatprep.subr.mxu0 0.0
    %174 = vmatpush2.xpose.msra.mxu0 0.0
    %175 = vmatprep.subr.mxu0 0.0
    %176 = vmatpush2.xpose.msra.mxu0 0.0
    %177 = vmatprep.subr.mxu0 0.0
    %178 = vmatpush2.xpose.msra.mxu0 0.0
    %179 = vmatprep.subr.mxu0 0.0
    %180 = vmatpush2.xpose.msra.mxu0 0.0
    %181 = vmatprep.subr.mxu0 0.0
    %182 = vmatpush2.xpose.msra.mxu0 0.0
    %183 = vmatprep.subr.mxu0 0.0
    %184 = vmatpush2.xpose.msra.mxu0 0.0
    %185 = vmatprep.subr.mxu0 0.0
    %186 = vmatpush2.xpose.msra.mxu0 0.0
    %187 = vmatprep.mubr.f32.mxu0 0.0
    %188 = vmatmul.mubr.f32.gmra.mxu0 %v115
    %v189 = vpop.f32.mrf.mxu0
    %v190 = vadd.f32 %v105, %v189
    %v191 = vpop.f32.mrf.mxu0
    %192 = vmatprep.mubr.f32.mxu0 0.0
    %193 = vmatmul.mubr.f32.gmra.mxu0 %v117
    %v194 = vpop.f32.mrf.mxu0
    %v195 = vadd.f32 %v106, %v194
    %v196 = vpop.f32.mrf.mxu0
    %197 = vdwg.mxu0
    %200 = vrot.lane.b32.xlu0 %v79, 126
    %v201 = vpop.permute.xlu0 %200
    %202 = vrot.lane.b32.xlu0 %v80, 126
    %v203 = vpop.permute.xlu0 %202
    %v204 = vsel %vm88, %v79, 0
    %v206 = vsel %vm88, %v80, 0
    %v208 = vsel %vm88, %v201, 0
    %v210 = vsel %vm88, %v203, 0
    %212 = vmatprep.subr.mxu0 0.0
    %213 = vmatpush1.xpose.msra.mxu0 0.0
    %214 = vmatprep.subr.mxu0 0.0
    %215 = vmatpush1.xpose.msra.mxu0 0.0
    %216 = vmatprep.subr.mxu0 0.0
    %217 = vmatpush1.xpose.msra.mxu0 0.0
    %218 = vmatprep.subr.mxu0 0.0
    %219 = vmatpush1.xpose.msra.mxu0 0.0
    %220 = vmatprep.subr.mxu0 0.0
    %221 = vmatpush1.xpose.msra.mxu0 0.0
    %222 = vmatprep.subr.mxu0 0.0
    %223 = vmatpush1.xpose.msra.mxu0 0.0
    %224 = vmatprep.subr.mxu0 0.0
    %225 = vmatpush1.xpose.msra.mxu0 0.0
    %226 = vmatprep.subr.mxu0 0.0
    %227 = vmatpush1.xpose.msra.mxu0 0.0
    %228 = vmatprep.subr.mxu0 0.0
    %229 = vmatpush1.xpose.msra.mxu0 0.0
    %230 = vmatprep.subr.mxu0 0.0
    %231 = vmatpush1.xpose.msra.mxu0 0.0
    %232 = vmatprep.subr.mxu0 0.0
    %233 = vmatpush1.xpose.msra.mxu0 0.0
    %234 = vmatprep.subr.mxu0 0.0
    %235 = vmatpush1.xpose.msra.mxu0 0.0
    %236 = vmatprep.subr.mxu0 0.0
    %237 = vmatpush1.xpose.msra.mxu0 0.0
    %238 = vmatprep.subr.mxu0 0.0
    %239 = vmatpush1.xpose.msra.mxu0 0.0
    %240 = vmatprep.subr.mxu0 0.0
    %241 = vmatpush1.xpose.msra.mxu0 %v210
    %242 = vmatprep.subr.mxu0 0.0
    %243 = vmatpush1.xpose.msra.mxu0 %v208
    %244 = vmatprep.subr.mxu0 0.0
    %245 = vmatpush2.xpose.msra.mxu0 0.0
    %246 = vmatprep.subr.mxu0 0.0
    %247 = vmatpush2.xpose.msra.mxu0 0.0
    %248 = vmatprep.subr.mxu0 0.0
    %249 = vmatpush2.xpose.msra.mxu0 0.0
    %250 = vmatprep.subr.mxu0 0.0
    %251 = vmatpush2.xpose.msra.mxu0 0.0
    %252 = vmatprep.subr.mxu0 0.0
    %253 = vmatpush2.xpose.msra.mxu0 0.0
    %254 = vmatprep.subr.mxu0 0.0
    %255 = vmatpush2.xpose.msra.mxu0 0.0
    %256 = vmatprep.subr.mxu0 0.0
    %257 = vmatpush2.xpose.msra.mxu0 0.0
    %258 = vmatprep.subr.mxu0 0.0
    %259 = vmatpush2.xpose.msra.mxu0 0.0
    %260 = vmatprep.subr.mxu0 0.0
    %261 = vmatpush2.xpose.msra.mxu0 0.0
    %262 = vmatprep.subr.mxu0 0.0
    %263 = vmatpush2.xpose.msra.mxu0 0.0
    %264 = vmatprep.subr.mxu0 0.0
    %265 = vmatpush2.xpose.msra.mxu0 0.0
    %266 = vmatprep.subr.mxu0 0.0
    %267 = vmatpush2.xpose.msra.mxu0 0.0
    %268 = vmatprep.subr.mxu0 0.0
    %269 = vmatpush2.xpose.msra.mxu0 0.0
    %270 = vmatprep.subr.mxu0 0.0
    %271 = vmatpush2.xpose.msra.mxu0 0.0
    %272 = vmatprep.subr.mxu0 0.0
    %273 = vmatpush2.xpose.msra.mxu0 0.0
    %274 = vmatprep.subr.mxu0 0.0
    %275 = vmatpush2.xpose.msra.mxu0 0.0
    %276 = vmatprep.mubr.f32.mxu0 0.0
    %277 = vmatmul.mubr.f32.gmra.mxu0 %v204
    %v278 = vpop.f32.mrf.mxu0
    %v279 = vadd.f32 %v107, %v278
    %v280 = vpop.f32.mrf.mxu0
    %281 = vmatprep.mubr.f32.mxu0 0.0
    %282 = vmatmul.mubr.f32.gmra.mxu0 %v206
    %v283 = vpop.f32.mrf.mxu0
    %v284 = vadd.f32 %v108, %v283
    %v285 = vpop.f32.mrf.mxu0
    %286 = vdwg.mxu0
    %v287 = vmul.f32 %v190, 0.70710677
    %v288 = vmul.f32 %v195, 0.70710677
    %v289 = vmul.f32 %v279, 0.70710677
    %v290 = vmul.f32 %v284, 0.70710677
    %vm291 = vcmask 130048
    %v292 = vsel %vm291, %v287, -inf
    %293 = vmax.xlane.f32.xlu0 %v292
    %v294 = vpop.xlane.xlu0 %293
    %v295 = vsel %vm291, %v288, -inf
    %296 = vmax.xlane.f32.xlu0 %v295
    %v297 = vpop.xlane.xlu0 %296
    %v298 = vsel %vm291, %v289, -inf
    %299 = vmax.xlane.f32.xlu0 %v298
    %v300 = vpop.xlane.xlu0 %299
    %v301 = vsel %vm291, %v290, -inf
    %302 = vmax.xlane.f32.xlu0 %v301
    %v303 = vpop.xlane.xlu0 %302
    %v304 = vsub.f32 %v287, %v294
    %v305 = vsub.f32 %v288, %v297
    %v306 = vsub.f32 %v289, %v300
    %v307 = vsub.f32 %v290, %v303
    %v308 = vmul.f32 %v304, 1.442695
    %v309 = vpow.pop %v308
    %v310 = vmul.f32 %v305, 1.442695
    %v311 = vpow.pop %v310
    %v312 = vmul.f32 %v306, 1.442695
    %v313 = vpow.pop %v312
    %v314 = vmul.f32 %v307, 1.442695
    %v315 = vpow.pop %v314
    %v316 = vsel %vm291, %v309, 0.0
    %317 = vadd.xlane.f32.xlu0 %v316
    %v318 = vpop.xlane.xlu0 %317
    %v319 = vsel %vm291, %v311, 0.0
    %320 = vadd.xlane.f32.xlu0 %v319
    %v321 = vpop.xlane.xlu0 %320
    %v322 = vsel %vm291, %v313, 0.0
    %323 = vadd.xlane.f32.xlu0 %v322
    %v324 = vpop.xlane.xlu0 %323
    %v325 = vsel %vm291, %v315, 0.0
    %326 = vadd.xlane.f32.xlu0 %v325
    %v327 = vpop.xlane.xlu0 %326
    %v328 = vrcp.pop %v318
    %v329 = vrcp.pop %v321
    %v330 = vrcp.pop %v324
    %v331 = vrcp.pop %v327
    %v332 = vmul.f32 %v309, %v328
    %v333 = vmul.f32 %v311, %v329
    %v334 = vmul.f32 %v313, %v330
    %v335 = vmul.f32 %v315, %v331
    %336 = vrot.lane.b32.xlu0 %v77, 124
    %v337 = vpop.permute.xlu0 %336
    %338 = vrot.lane.b32.xlu0 %v78, 124
    %v339 = vpop.permute.xlu0 %338
    %v343 = vsel %vm291, %v332, 0
    %v346 = vsel %vm291, %v333, 0
    %348 = vmatprep.subr.mxu0 0.0
    %349 = vmatpush1.msra.mxu0 0.0
    %350 = vmatprep.subr.mxu0 0.0
    %351 = vmatpush1.msra.mxu0 0.0
    %352 = vmatprep.subr.mxu0 0.0
    %353 = vmatpush1.msra.mxu0 0.0
    %354 = vmatprep.subr.mxu0 0.0
    %355 = vmatpush1.msra.mxu0 0.0
    %356 = vmatprep.subr.mxu0 0.0
    %357 = vmatpush1.msra.mxu0 0.0
    %358 = vmatprep.subr.mxu0 0.0
    %359 = vmatpush1.msra.mxu0 0.0
    %360 = vmatprep.subr.mxu0 0.0
    %361 = vmatpush1.msra.mxu0 0.0
    %362 = vmatprep.subr.mxu0 0.0
    %363 = vmatpush1.msra.mxu0 0.0
    %364 = vmatprep.subr.mxu0 0.0
    %365 = vmatpush1.msra.mxu0 0.0
    %366 = vmatprep.subr.mxu0 0.0
    %367 = vmatpush1.msra.mxu0 0.0
    %368 = vmatprep.subr.mxu0 0.0
    %369 = vmatpush1.msra.mxu0 0.0
    %370 = vmatprep.subr.mxu0 0.0
    %371 = vmatpush1.msra.mxu0 0.0
    %372 = vmatprep.subr.mxu0 0.0
    %373 = vmatpush1.msra.mxu0 0.0
    %374 = vmatprep.subr.mxu0 0.0
    %375 = vmatpush1.msra.mxu0 0.0
    %376 = vmatprep.subr.mxu0 0.0
    %377 = vmatpush1.msra.mxu0 %v339
    %378 = vmatprep.subr.mxu0 0.0
    %379 = vmatpush1.msra.mxu0 %v337
    %380 = vmatprep.subr.mxu0 0.0
    %381 = vmatpush2.msra.mxu0 0.0
    %382 = vmatprep.subr.mxu0 0.0
    %383 = vmatpush2.msra.mxu0 0.0
    %384 = vmatprep.subr.mxu0 0.0
    %385 = vmatpush2.msra.mxu0 0.0
    %386 = vmatprep.subr.mxu0 0.0
    %387 = vmatpush2.msra.mxu0 0.0
    %388 = vmatprep.subr.mxu0 0.0
    %389 = vmatpush2.msra.mxu0 0.0
    %390 = vmatprep.subr.mxu0 0.0
    %391 = vmatpush2.msra.mxu0 0.0
    %392 = vmatprep.subr.mxu0 0.0
    %393 = vmatpush2.msra.mxu0 0.0
    %394 = vmatprep.subr.mxu0 0.0
    %395 = vmatpush2.msra.mxu0 0.0
    %396 = vmatprep.subr.mxu0 0.0
    %397 = vmatpush2.msra.mxu0 0.0
    %398 = vmatprep.subr.mxu0 0.0
    %399 = vmatpush2.msra.mxu0 0.0
    %400 = vmatprep.subr.mxu0 0.0
    %401 = vmatpush2.msra.mxu0 0.0
    %402 = vmatprep.subr.mxu0 0.0
    %403 = vmatpush2.msra.mxu0 0.0
    %404 = vmatprep.subr.mxu0 0.0
    %405 = vmatpush2.msra.mxu0 0.0
    %406 = vmatprep.subr.mxu0 0.0
    %407 = vmatpush2.msra.mxu0 0.0
    %408 = vmatprep.subr.mxu0 0.0
    %409 = vmatpush2.msra.mxu0 0.0
    %410 = vmatprep.subr.mxu0 0.0
    %411 = vmatpush2.msra.mxu0 0.0
    %412 = vmatprep.mubr.f32.mxu0 0.0
    %413 = vmatmul.mubr.f32.gmra.mxu0 %v343
    %v414 = vpop.f32.mrf.mxu0
    %v415 = vadd.f32 0.0, %v414
    %v416 = vpop.f32.mrf.mxu0
    %417 = vmatprep.mubr.f32.mxu0 0.0
    %418 = vmatmul.mubr.f32.gmra.mxu0 %v346
    %v419 = vpop.f32.mrf.mxu0
    %v420 = vadd.f32 0.0, %v419
    %v421 = vpop.f32.mrf.mxu0
    %422 = vdwg.mxu0
    %423 = vrot.lane.b32.xlu0 %v79, 124
    %v424 = vpop.permute.xlu0 %423
    %425 = vrot.lane.b32.xlu0 %v80, 124
    %v426 = vpop.permute.xlu0 %425
    %v430 = vsel %vm291, %v334, 0
    %v433 = vsel %vm291, %v335, 0
    %435 = vmatprep.subr.mxu0 0.0
    %436 = vmatpush1.msra.mxu0 0.0
    %437 = vmatprep.subr.mxu0 0.0
    %438 = vmatpush1.msra.mxu0 0.0
    %439 = vmatprep.subr.mxu0 0.0
    %440 = vmatpush1.msra.mxu0 0.0
    %441 = vmatprep.subr.mxu0 0.0
    %442 = vmatpush1.msra.mxu0 0.0
    %443 = vmatprep.subr.mxu0 0.0
    %444 = vmatpush1.msra.mxu0 0.0
    %445 = vmatprep.subr.mxu0 0.0
    %446 = vmatpush1.msra.mxu0 0.0
    %447 = vmatprep.subr.mxu0 0.0
    %448 = vmatpush1.msra.mxu0 0.0
    %449 = vmatprep.subr.mxu0 0.0
    %450 = vmatpush1.msra.mxu0 0.0
    %451 = vmatprep.subr.mxu0 0.0
    %452 = vmatpush1.msra.mxu0 0.0
    %453 = vmatprep.subr.mxu0 0.0
    %454 = vmatpush1.msra.mxu0 0.0
    %455 = vmatprep.subr.mxu0 0.0
    %456 = vmatpush1.msra.mxu0 0.0
    %457 = vmatprep.subr.mxu0 0.0
    %458 = vmatpush1.msra.mxu0 0.0
    %459 = vmatprep.subr.mxu0 0.0
    %460 = vmatpush1.msra.mxu0 0.0
    %461 = vmatprep.subr.mxu0 0.0
    %462 = vmatpush1.msra.mxu0 0.0
    %463 = vmatprep.subr.mxu0 0.0
    %464 = vmatpush1.msra.mxu0 %v426
    %465 = vmatprep.subr.mxu0 0.0
    %466 = vmatpush1.msra.mxu0 %v424
    %467 = vmatprep.subr.mxu0 0.0
    %468 = vmatpush2.msra.mxu0 0.0
    %469 = vmatprep.subr.mxu0 0.0
    %470 = vmatpush2.msra.mxu0 0.0
    %471 = vmatprep.subr.mxu0 0.0
    %472 = vmatpush2.msra.mxu0 0.0
    %473 = vmatprep.subr.mxu0 0.0
    %474 = vmatpush2.msra.mxu0 0.0
    %475 = vmatprep.subr.mxu0 0.0
    %476 = vmatpush2.msra.mxu0 0.0
    %477 = vmatprep.subr.mxu0 0.0
    %478 = vmatpush2.msra.mxu0 0.0
    %479 = vmatprep.subr.mxu0 0.0
    %480 = vmatpush2.msra.mxu0 0.0
    %481 = vmatprep.subr.mxu0 0.0
    %482 = vmatpush2.msra.mxu0 0.0
    %483 = vmatprep.subr.mxu0 0.0
    %484 = vmatpush2.msra.mxu0 0.0
    %485 = vmatprep.subr.mxu0 0.0
    %486 = vmatpush2.msra.mxu0 0.0
    %487 = vmatprep.subr.mxu0 0.0
    %488 = vmatpush2.msra.mxu0 0.0
    %489 = vmatprep.subr.mxu0 0.0
    %490 = vmatpush2.msra.mxu0 0.0
    %491 = vmatprep.subr.mxu0 0.0
    %492 = vmatpush2.msra.mxu0 0.0
    %493 = vmatprep.subr.mxu0 0.0
    %494 = vmatpush2.msra.mxu0 0.0
    %495 = vmatprep.subr.mxu0 0.0
    %496 = vmatpush2.msra.mxu0 0.0
    %497 = vmatprep.subr.mxu0 0.0
    %498 = vmatpush2.msra.mxu0 0.0
    %499 = vmatprep.mubr.f32.mxu0 0.0
    %500 = vmatmul.mubr.f32.gmra.mxu0 %v430
    %v501 = vpop.f32.mrf.mxu0
    %v502 = vadd.f32 0.0, %v501
    %v503 = vpop.f32.mrf.mxu0
    %504 = vmatprep.mubr.f32.mxu0 0.0
    %505 = vmatmul.mubr.f32.gmra.mxu0 %v433
    %v506 = vpop.f32.mrf.mxu0
    %v507 = vadd.f32 0.0, %v506
    %v508 = vpop.f32.mrf.mxu0
    %509 = vdwg.mxu0
    %v510 = vlaneseq
    %v511 = vshrl.u32 %v510, 7
    %v512 = vsub.s32 4, %v511
    %v513 = vrot.slane %v16, %v512
    %v514 = vmul.f32 %v415, %v513
    %v515 = vmul.f32 %v420, %v513
    %v516 = vmul.f32 %v502, %v513
    %v517 = vmul.f32 %v507, %v513
    %v518 = vsel %vm88, %v514, 0.0
    %519 = vadd.xlane.f32.xlu0 %v518
    %v520 = vpop.xlane.xlu0 %519
    %v521 = vsel %vm88, %v515, 0.0
    %522 = vadd.xlane.f32.xlu0 %v521
    %v523 = vpop.xlane.xlu0 %522
    %v524 = vsel %vm88, %v516, 0.0
    %525 = vadd.xlane.f32.xlu0 %v524
    %v526 = vpop.xlane.xlu0 %525
    %v527 = vsel %vm88, %v517, 0.0
    %528 = vadd.xlane.f32.xlu0 %v527
    %v529 = vpop.xlane.xlu0 %528
    %v530 = vadd.f32 %v86, %v520
    %v531 = vadd.f32 %v86, %v523
    %v532 = vadd.f32 %v86, %v526
    %v533 = vadd.f32 %v86, %v529
    %534 = vrot.lane.b32.xlu0 %v77, 122
    %v535 = vpop.permute.xlu0 %534
    %536 = vrot.lane.b32.xlu0 %v78, 122
    %v537 = vpop.permute.xlu0 %536
    %538 = vrot.lane.b32.xlu0 %v79, 122
    %v539 = vpop.permute.xlu0 %538
    %540 = vrot.lane.b32.xlu0 %v80, 122
    %v541 = vpop.permute.xlu0 %540
    %v546 = vsel %vm88, %v535, 0.0
    %547 = vadd.xlane.f32.xlu0 %v546
    %v548 = vpop.xlane.xlu0 %547
    %v549 = vsel %vm88, %v537, 0.0
    %550 = vadd.xlane.f32.xlu0 %v549
    %v551 = vpop.xlane.xlu0 %550
    %v552 = vsel %vm88, %v539, 0.0
    %553 = vadd.xlane.f32.xlu0 %v552
    %v554 = vpop.xlane.xlu0 %553
    %v555 = vsel %vm88, %v541, 0.0
    %556 = vadd.xlane.f32.xlu0 %v555
    %v557 = vpop.xlane.xlu0 %556
    %v558 = vmul.f32 %v548, %v104
    %v559 = vmul.f32 %v551, %v104
    %v560 = vmul.f32 %v554, %v104
    %v561 = vmul.f32 %v557, %v104
    %562 = vrot.lane.b32.xlu0 %v77, 120
    %v563 = vpop.permute.xlu0 %562
    %564 = vrot.lane.b32.xlu0 %v78, 120
    %v565 = vpop.permute.xlu0 %564
    %v566 = vsel %vm88, %v535, 0
    %v568 = vsel %vm88, %v537, 0
    %v570 = vsel %vm88, %v563, 0
    %v572 = vsel %vm88, %v565, 0
    %574 = vmatprep.subr.mxu0 0.0
    %575 = vmatpush1.xpose.msra.mxu0 0.0
    %576 = vmatprep.subr.mxu0 0.0
    %577 = vmatpush1.xpose.msra.mxu0 0.0
    %578 = vmatprep.subr.mxu0 0.0
    %579 = vmatpush1.xpose.msra.mxu0 0.0
    %580 = vmatprep.subr.mxu0 0.0
    %581 = vmatpush1.xpose.msra.mxu0 0.0
    %582 = vmatprep.subr.mxu0 0.0
    %583 = vmatpush1.xpose.msra.mxu0 0.0
    %584 = vmatprep.subr.mxu0 0.0
    %585 = vmatpush1.xpose.msra.mxu0 0.0
    %586 = vmatprep.subr.mxu0 0.0
    %587 = vmatpush1.xpose.msra.mxu0 0.0
    %588 = vmatprep.subr.mxu0 0.0
    %589 = vmatpush1.xpose.msra.mxu0 0.0
    %590 = vmatprep.subr.mxu0 0.0
    %591 = vmatpush1.xpose.msra.mxu0 0.0
    %592 = vmatprep.subr.mxu0 0.0
    %593 = vmatpush1.xpose.msra.mxu0 0.0
    %594 = vmatprep.subr.mxu0 0.0
    %595 = vmatpush1.xpose.msra.mxu0 0.0
    %596 = vmatprep.subr.mxu0 0.0
    %597 = vmatpush1.xpose.msra.mxu0 0.0
    %598 = vmatprep.subr.mxu0 0.0
    %599 = vmatpush1.xpose.msra.mxu0 0.0
    %600 = vmatprep.subr.mxu0 0.0
    %601 = vmatpush1.xpose.msra.mxu0 0.0
    %602 = vmatprep.subr.mxu0 0.0
    %603 = vmatpush1.xpose.msra.mxu0 %v572
    %604 = vmatprep.subr.mxu0 0.0
    %605 = vmatpush1.xpose.msra.mxu0 %v570
    %606 = vmatprep.subr.mxu0 0.0
    %607 = vmatpush2.xpose.msra.mxu0 0.0
    %608 = vmatprep.subr.mxu0 0.0
    %609 = vmatpush2.xpose.msra.mxu0 0.0
    %610 = vmatprep.subr.mxu0 0.0
    %611 = vmatpush2.xpose.msra.mxu0 0.0
    %612 = vmatprep.subr.mxu0 0.0
    %613 = vmatpush2.xpose.msra.mxu0 0.0
    %614 = vmatprep.subr.mxu0 0.0
    %615 = vmatpush2.xpose.msra.mxu0 0.0
    %616 = vmatprep.subr.mxu0 0.0
    %617 = vmatpush2.xpose.msra.mxu0 0.0
    %618 = vmatprep.subr.mxu0 0.0
    %619 = vmatpush2.xpose.msra.mxu0 0.0
    %620 = vmatprep.subr.mxu0 0.0
    %621 = vmatpush2.xpose.msra.mxu0 0.0
    %622 = vmatprep.subr.mxu0 0.0
    %623 = vmatpush2.xpose.msra.mxu0 0.0
    %624 = vmatprep.subr.mxu0 0.0
    %625 = vmatpush2.xpose.msra.mxu0 0.0
    %626 = vmatprep.subr.mxu0 0.0
    %627 = vmatpush2.xpose.msra.mxu0 0.0
    %628 = vmatprep.subr.mxu0 0.0
    %629 = vmatpush2.xpose.msra.mxu0 0.0
    %630 = vmatprep.subr.mxu0 0.0
    %631 = vmatpush2.xpose.msra.mxu0 0.0
    %632 = vmatprep.subr.mxu0 0.0
    %633 = vmatpush2.xpose.msra.mxu0 0.0
    %634 = vmatprep.subr.mxu0 0.0
    %635 = vmatpush2.xpose.msra.mxu0 0.0
    %636 = vmatprep.subr.mxu0 0.0
    %637 = vmatpush2.xpose.msra.mxu0 0.0
    %638 = vmatprep.mubr.f32.mxu0 0.0
    %639 = vmatmul.mubr.f32.gmra.mxu0 %v566
    %v640 = vpop.f32.mrf.mxu0
    %v641 = vadd.f32 %v558, %v640
    %v642 = vpop.f32.mrf.mxu0
    %643 = vmatprep.mubr.f32.mxu0 0.0
    %644 = vmatmul.mubr.f32.gmra.mxu0 %v568
    %v645 = vpop.f32.mrf.mxu0
    %v646 = vadd.f32 %v559, %v645
    %v647 = vpop.f32.mrf.mxu0
    %648 = vdwg.mxu0
    %649 = vrot.lane.b32.xlu0 %v79, 120
    %v650 = vpop.permute.xlu0 %649
    %651 = vrot.lane.b32.xlu0 %v80, 120
    %v652 = vpop.permute.xlu0 %651
    %v653 = vsel %vm88, %v539, 0
    %v655 = vsel %vm88, %v541, 0
    %v657 = vsel %vm88, %v650, 0
    %v659 = vsel %vm88, %v652, 0
    %661 = vmatprep.subr.mxu0 0.0
    %662 = vmatpush1.xpose.msra.mxu0 0.0
    %663 = vmatprep.subr.mxu0 0.0
    %664 = vmatpush1.xpose.msra.mxu0 0.0
    %665 = vmatprep.subr.mxu0 0.0
    %666 = vmatpush1.xpose.msra.mxu0 0.0
    %667 = vmatprep.subr.mxu0 0.0
    %668 = vmatpush1.xpose.msra.mxu0 0.0
    %669 = vmatprep.subr.mxu0 0.0
    %670 = vmatpush1.xpose.msra.mxu0 0.0
    %671 = vmatprep.subr.mxu0 0.0
    %672 = vmatpush1.xpose.msra.mxu0 0.0
    %673 = vmatprep.subr.mxu0 0.0
    %674 = vmatpush1.xpose.msra.mxu0 0.0
    %675 = vmatprep.subr.mxu0 0.0
    %676 = vmatpush1.xpose.msra.mxu0 0.0
    %677 = vmatprep.subr.mxu0 0.0
    %678 = vmatpush1.xpose.msra.mxu0 0.0
    %679 = vmatprep.subr.mxu0 0.0
    %680 = vmatpush1.xpose.msra.mxu0 0.0
    %681 = vmatprep.subr.mxu0 0.0
    %682 = vmatpush1.xpose.msra.mxu0 0.0
    %683 = vmatprep.subr.mxu0 0.0
    %684 = vmatpush1.xpose.msra.mxu0 0.0
    %685 = vmatprep.subr.mxu0 0.0
    %686 = vmatpush1.xpose.msra.mxu0 0.0
    %687 = vmatprep.subr.mxu0 0.0
    %688 = vmatpush1.xpose.msra.mxu0 0.0
    %689 = vmatprep.subr.mxu0 0.0
    %690 = vmatpush1.xpose.msra.mxu0 %v659
    %691 = vmatprep.subr.mxu0 0.0
    %692 = vmatpush1.xpose.msra.mxu0 %v657
    %693 = vmatprep.subr.mxu0 0.0
    %694 = vmatpush2.xpose.msra.mxu0 0.0
    %695 = vmatprep.subr.mxu0 0.0
    %696 = vmatpush2.xpose.msra.mxu0 0.0
    %697 = vmatprep.subr.mxu0 0.0
    %698 = vmatpush2.xpose.msra.mxu0 0.0
    %699 = vmatprep.subr.mxu0 0.0
    %700 = vmatpush2.xpose.msra.mxu0 0.0
    %701 = vmatprep.subr.mxu0 0.0
    %702 = vmatpush2.xpose.msra.mxu0 0.0
    %703 = vmatprep.subr.mxu0 0.0
    %704 = vmatpush2.xpose.msra.mxu0 0.0
    %705 = vmatprep.subr.mxu0 0.0
    %706 = vmatpush2.xpose.msra.mxu0 0.0
    %707 = vmatprep.subr.mxu0 0.0
    %708 = vmatpush2.xpose.msra.mxu0 0.0
    %709 = vmatprep.subr.mxu0 0.0
    %710 = vmatpush2.xpose.msra.mxu0 0.0
    %711 = vmatprep.subr.mxu0 0.0
    %712 = vmatpush2.xpose.msra.mxu0 0.0
    %713 = vmatprep.subr.mxu0 0.0
    %714 = vmatpush2.xpose.msra.mxu0 0.0
    %715 = vmatprep.subr.mxu0 0.0
    %716 = vmatpush2.xpose.msra.mxu0 0.0
    %717 = vmatprep.subr.mxu0 0.0
    %718 = vmatpush2.xpose.msra.mxu0 0.0
    %719 = vmatprep.subr.mxu0 0.0
    %720 = vmatpush2.xpose.msra.mxu0 0.0
    %721 = vmatprep.subr.mxu0 0.0
    %722 = vmatpush2.xpose.msra.mxu0 0.0
    %723 = vmatprep.subr.mxu0 0.0
    %724 = vmatpush2.xpose.msra.mxu0 0.0
    %725 = vmatprep.mubr.f32.mxu0 0.0
    %726 = vmatmul.mubr.f32.gmra.mxu0 %v653
    %v727 = vpop.f32.mrf.mxu0
    %v728 = vadd.f32 %v560, %v727
    %v729 = vpop.f32.mrf.mxu0
    %730 = vmatprep.mubr.f32.mxu0 0.0
    %731 = vmatmul.mubr.f32.gmra.mxu0 %v655
    %v732 = vpop.f32.mrf.mxu0
    %v733 = vadd.f32 %v561, %v732
    %v734 = vpop.f32.mrf.mxu0
    %735 = vdwg.mxu0
    %v736 = vmul.f32 %v641, 0.70710677
    %v737 = vmul.f32 %v646, 0.70710677
    %v738 = vmul.f32 %v728, 0.70710677
    %v739 = vmul.f32 %v733, 0.70710677
    %v740 = vsel %vm291, %v736, -inf
    %741 = vmax.xlane.f32.xlu0 %v740
    %v742 = vpop.xlane.xlu0 %741
    %v743 = vsel %vm291, %v737, -inf
    %744 = vmax.xlane.f32.xlu0 %v743
    %v745 = vpop.xlane.xlu0 %744
    %v746 = vsel %vm291, %v738, -inf
    %747 = vmax.xlane.f32.xlu0 %v746
    %v748 = vpop.xlane.xlu0 %747
    %v749 = vsel %vm291, %v739, -inf
    %750 = vmax.xlane.f32.xlu0 %v749
    %v751 = vpop.xlane.xlu0 %750
    %v752 = vsub.f32 %v736, %v742
    %v753 = vsub.f32 %v737, %v745
    %v754 = vsub.f32 %v738, %v748
    %v755 = vsub.f32 %v739, %v751
    %v756 = vmul.f32 %v752, 1.442695
    %v757 = vpow.pop %v756
    %v758 = vmul.f32 %v753, 1.442695
    %v759 = vpow.pop %v758
    %v760 = vmul.f32 %v754, 1.442695
    %v761 = vpow.pop %v760
    %v762 = vmul.f32 %v755, 1.442695
    %v763 = vpow.pop %v762
    %v764 = vsel %vm291, %v757, 0.0
    %765 = vadd.xlane.f32.xlu0 %v764
    %v766 = vpop.xlane.xlu0 %765
    %v767 = vsel %vm291, %v759, 0.0
    %768 = vadd.xlane.f32.xlu0 %v767
    %v769 = vpop.xlane.xlu0 %768
    %v770 = vsel %vm291, %v761, 0.0
    %771 = vadd.xlane.f32.xlu0 %v770
    %v772 = vpop.xlane.xlu0 %771
    %v773 = vsel %vm291, %v763, 0.0
    %774 = vadd.xlane.f32.xlu0 %v773
    %v775 = vpop.xlane.xlu0 %774
    %v776 = vrcp.pop %v766
    %v777 = vrcp.pop %v769
    %v778 = vrcp.pop %v772
    %v779 = vrcp.pop %v775
    %v780 = vmul.f32 %v757, %v776
    %v781 = vmul.f32 %v759, %v777
    %v782 = vmul.f32 %v761, %v778
    %v783 = vmul.f32 %v763, %v779
    %784 = vrot.lane.b32.xlu0 %v77, 118
    %v785 = vpop.permute.xlu0 %784
    %786 = vrot.lane.b32.xlu0 %v78, 118
    %v787 = vpop.permute.xlu0 %786
    %v791 = vsel %vm291, %v780, 0
    %v794 = vsel %vm291, %v781, 0
    %796 = vmatprep.subr.mxu0 0.0
    %797 = vmatpush1.msra.mxu0 0.0
    %798 = vmatprep.subr.mxu0 0.0
    %799 = vmatpush1.msra.mxu0 0.0
    %800 = vmatprep.subr.mxu0 0.0
    %801 = vmatpush1.msra.mxu0 0.0
    %802 = vmatprep.subr.mxu0 0.0
    %803 = vmatpush1.msra.mxu0 0.0
    %804 = vmatprep.subr.mxu0 0.0
    %805 = vmatpush1.msra.mxu0 0.0
    %806 = vmatprep.subr.mxu0 0.0
    %807 = vmatpush1.msra.mxu0 0.0
    %808 = vmatprep.subr.mxu0 0.0
    %809 = vmatpush1.msra.mxu0 0.0
    %810 = vmatprep.subr.mxu0 0.0
    %811 = vmatpush1.msra.mxu0 0.0
    %812 = vmatprep.subr.mxu0 0.0
    %813 = vmatpush1.msra.mxu0 0.0
    %814 = vmatprep.subr.mxu0 0.0
    %815 = vmatpush1.msra.mxu0 0.0
    %816 = vmatprep.subr.mxu0 0.0
    %817 = vmatpush1.msra.mxu0 0.0
    %818 = vmatprep.subr.mxu0 0.0
    %819 = vmatpush1.msra.mxu0 0.0
    %820 = vmatprep.subr.mxu0 0.0
    %821 = vmatpush1.msra.mxu0 0.0
    %822 = vmatprep.subr.mxu0 0.0
    %823 = vmatpush1.msra.mxu0 0.0
    %824 = vmatprep.subr.mxu0 0.0
    %825 = vmatpush1.msra.mxu0 %v787
    %826 = vmatprep.subr.mxu0 0.0
    %827 = vmatpush1.msra.mxu0 %v785
    %828 = vmatprep.subr.mxu0 0.0
    %829 = vmatpush2.msra.mxu0 0.0
    %830 = vmatprep.subr.mxu0 0.0
    %831 = vmatpush2.msra.mxu0 0.0
    %832 = vmatprep.subr.mxu0 0.0
    %833 = vmatpush2.msra.mxu0 0.0
    %834 = vmatprep.subr.mxu0 0.0
    %835 = vmatpush2.msra.mxu0 0.0
    %836 = vmatprep.subr.mxu0 0.0
    %837 = vmatpush2.msra.mxu0 0.0
    %838 = vmatprep.subr.mxu0 0.0
    %839 = vmatpush2.msra.mxu0 0.0
    %840 = vmatprep.subr.mxu0 0.0
    %841 = vmatpush2.msra.mxu0 0.0
    %842 = vmatprep.subr.mxu0 0.0
    %843 = vmatpush2.msra.mxu0 0.0
    %844 = vmatprep.subr.mxu0 0.0
    %845 = vmatpush2.msra.mxu0 0.0
    %846 = vmatprep.subr.mxu0 0.0
    %847 = vmatpush2.msra.mxu0 0.0
    %848 = vmatprep.subr.mxu0 0.0
    %849 = vmatpush2.msra.mxu0 0.0
    %850 = vmatprep.subr.mxu0 0.0
    %851 = vmatpush2.msra.mxu0 0.0
    %852 = vmatprep.subr.mxu0 0.0
    %853 = vmatpush2.msra.mxu0 0.0
    %854 = vmatprep.subr.mxu0 0.0
    %855 = vmatpush2.msra.mxu0 0.0
    %856 = vmatprep.subr.mxu0 0.0
    %857 = vmatpush2.msra.mxu0 0.0
    %858 = vmatprep.subr.mxu0 0.0
    %859 = vmatpush2.msra.mxu0 0.0
    %860 = vmatprep.mubr.f32.mxu0 0.0
    %861 = vmatmul.mubr.f32.gmra.mxu0 %v791
    %v862 = vpop.f32.mrf.mxu0
    %v863 = vadd.f32 0.0, %v862
    %v864 = vpop.f32.mrf.mxu0
    %865 = vmatprep.mubr.f32.mxu0 0.0
    %866 = vmatmul.mubr.f32.gmra.mxu0 %v794
    %v867 = vpop.f32.mrf.mxu0
    %v868 = vadd.f32 0.0, %v867
    %v869 = vpop.f32.mrf.mxu0
    %870 = vdwg.mxu0
    %871 = vrot.lane.b32.xlu0 %v79, 118
    %v872 = vpop.permute.xlu0 %871
    %873 = vrot.lane.b32.xlu0 %v80, 118
    %v874 = vpop.permute.xlu0 %873
    %v878 = vsel %vm291, %v782, 0
    %v881 = vsel %vm291, %v783, 0
    %883 = vmatprep.subr.mxu0 0.0
    %884 = vmatpush1.msra.mxu0 0.0
    %885 = vmatprep.subr.mxu0 0.0
    %886 = vmatpush1.msra.mxu0 0.0
    %887 = vmatprep.subr.mxu0 0.0
    %888 = vmatpush1.msra.mxu0 0.0
    %889 = vmatprep.subr.mxu0 0.0
    %890 = vmatpush1.msra.mxu0 0.0
    %891 = vmatprep.subr.mxu0 0.0
    %892 = vmatpush1.msra.mxu0 0.0
    %893 = vmatprep.subr.mxu0 0.0
    %894 = vmatpush1.msra.mxu0 0.0
    %895 = vmatprep.subr.mxu0 0.0
    %896 = vmatpush1.msra.mxu0 0.0
    %897 = vmatprep.subr.mxu0 0.0
    %898 = vmatpush1.msra.mxu0 0.0
    %899 = vmatprep.subr.mxu0 0.0
    %900 = vmatpush1.msra.mxu0 0.0
    %901 = vmatprep.subr.mxu0 0.0
    %902 = vmatpush1.msra.mxu0 0.0
    %903 = vmatprep.subr.mxu0 0.0
    %904 = vmatpush1.msra.mxu0 0.0
    %905 = vmatprep.subr.mxu0 0.0
    %906 = vmatpush1.msra.mxu0 0.0
    %907 = vmatprep.subr.mxu0 0.0
    %908 = vmatpush1.msra.mxu0 0.0
    %909 = vmatprep.subr.mxu0 0.0
    %910 = vmatpush1.msra.mxu0 0.0
    %911 = vmatprep.subr.mxu0 0.0
    %912 = vmatpush1.msra.mxu0 %v874
    %913 = vmatprep.subr.mxu0 0.0
    %914 = vmatpush1.msra.mxu0 %v872
    %915 = vmatprep.subr.mxu0 0.0
    %916 = vmatpush2.msra.mxu0 0.0
    %917 = vmatprep.subr.mxu0 0.0
    %918 = vmatpush2.msra.mxu0 0.0
    %919 = vmatprep.subr.mxu0 0.0
    %920 = vmatpush2.msra.mxu0 0.0
    %921 = vmatprep.subr.mxu0 0.0
    %922 = vmatpush2.msra.mxu0 0.0
    %923 = vmatprep.subr.mxu0 0.0
    %924 = vmatpush2.msra.mxu0 0.0
    %925 = vmatprep.subr.mxu0 0.0
    %926 = vmatpush2.msra.mxu0 0.0
    %927 = vmatprep.subr.mxu0 0.0
    %928 = vmatpush2.msra.mxu0 0.0
    %929 = vmatprep.subr.mxu0 0.0
    %930 = vmatpush2.msra.mxu0 0.0
    %931 = vmatprep.subr.mxu0 0.0
    %932 = vmatpush2.msra.mxu0 0.0
    %933 = vmatprep.subr.mxu0 0.0
    %934 = vmatpush2.msra.mxu0 0.0
    %935 = vmatprep.subr.mxu0 0.0
    %936 = vmatpush2.msra.mxu0 0.0
    %937 = vmatprep.subr.mxu0 0.0
    %938 = vmatpush2.msra.mxu0 0.0
    %939 = vmatprep.subr.mxu0 0.0
    %940 = vmatpush2.msra.mxu0 0.0
    %941 = vmatprep.subr.mxu0 0.0
    %942 = vmatpush2.msra.mxu0 0.0
    %943 = vmatprep.subr.mxu0 0.0
    %944 = vmatpush2.msra.mxu0 0.0
    %945 = vmatprep.subr.mxu0 0.0
    %946 = vmatpush2.msra.mxu0 0.0
    %947 = vmatprep.mubr.f32.mxu0 0.0
    %948 = vmatmul.mubr.f32.gmra.mxu0 %v878
    %v949 = vpop.f32.mrf.mxu0
    %v950 = vadd.f32 0.0, %v949
    %v951 = vpop.f32.mrf.mxu0
    %952 = vmatprep.mubr.f32.mxu0 0.0
    %953 = vmatmul.mubr.f32.gmra.mxu0 %v881
    %v954 = vpop.f32.mrf.mxu0
    %v955 = vadd.f32 0.0, %v954
    %v956 = vpop.f32.mrf.mxu0
    %957 = vdwg.mxu0
    %959 = vrot.lane.b32.xlu0 %v513, 126
    %v960 = vpop.permute.xlu0 %959
    %v962 = vmul.f32 %v863, %v960
    %v963 = vmul.f32 %v868, %v960
    %v964 = vmul.f32 %v950, %v960
    %v965 = vmul.f32 %v955, %v960
    %v966 = vsel %vm88, %v962, 0.0
    %967 = vadd.xlane.f32.xlu0 %v966
    %v968 = vpop.xlane.xlu0 %967
    %v969 = vsel %vm88, %v963, 0.0
    %970 = vadd.xlane.f32.xlu0 %v969
    %v971 = vpop.xlane.xlu0 %970
    %v972 = vsel %vm88, %v964, 0.0
    %973 = vadd.xlane.f32.xlu0 %v972
    %v974 = vpop.xlane.xlu0 %973
    %v975 = vsel %vm88, %v965, 0.0
    %976 = vadd.xlane.f32.xlu0 %v975
    %v977 = vpop.xlane.xlu0 %976
    %v978 = vadd.f32 %v530, %v968
    %v979 = vadd.f32 %v531, %v971
    %v980 = vadd.f32 %v532, %v974
    %v981 = vadd.f32 %v533, %v977
    %v986 = vlaneseq
    %v987 = vand.u32 %v986, 127
    %v988 = vlaneseq
    %v989 = vshrl.u32 %v988, 7
    %v990 = vsub.s32 %v987, %v989
    %v991 = vrot.slane %v978, %v990
    %v992 = vadd.s32 %v987, 4294967288
    %v993 = vlaneseq
    %v994 = vshrl.u32 %v993, 7
    %v995 = vsub.s32 %v992, %v994
    %v996 = vrot.slane %v979, %v995
    %vm997 = vcmask 130112
    %v998 = vsel %vm997, %v996, %v991
    %v999 = vlaneseq
    %v1000 = vshrl.u32 %v999, 7
    %v1001 = vsub.s32 %v987, %v1000
    %v1002 = vrot.slane %v980, %v1001
    %v1003 = vlaneseq
    %v1004 = vshrl.u32 %v1003, 7
    %v1005 = vsub.s32 %v992, %v1004
    %v1006 = vrot.slane %v981, %v1005
    %v1007 = vsel %vm997, %v1006, %v1002
    %vm1008 = vcmask 1041409
    %v1009 = vsel %vm1008, %v1007, %v998
    %vm1011 = vcmask 123904
    %1012 = vst.msk [vmem:[#allocation2] sm:$0x3] %vm1011, %v1009
    // Predicated region
    $region10: #{tpu_custom_call.1} parent=1 // pred_check
      _
    $region11: #{tpu_custom_call.1} parent=1 // pred_check_branch
      %1014 = sbr.rel (0) target = $region13
    $region12: #{tpu_custom_call.1} parent=1 // pred_region
      %s1016 = ssub.s32 32, 32
      %1017 = vsyncadd [#allocation3], %s1016
      %s1019 = sshll.u32 [#allocation2], 4
      %s1020 = int_to_ptr.vmem [resolvable:$true] %s1019
      %1022 = dma.vmem_to_hbm [thread:$0]  %s1020, 32, %s2, [#allocation3]
    $region13: #{tpu_custom_call.1} parent=1 // pred_fallthru
      _
    // Predicated region
    $region14: #{tpu_custom_call.1} parent=1 // pred_check
      _
    $region15: #{tpu_custom_call.1} parent=1 // pred_check_branch
      %1024 = sbr.rel (0) target = $region17
    $region16: #{tpu_custom_call.1} parent=1 // pred_region
      %1025 = dma.done [#allocation3], 32
    $region17: #{tpu_custom_call.1} parent=1 // pred_fallthru
      _
    %1026 = vsyncpa [#allocation3], 1

</llo_original>
